<compile_context>
chip_gen: v7x
topology: tpu7x:2x2x1
jax: 0.10.0
libtpu: 0.0.40
codegen_flags: <defaults>
</compile_context>

<pallas_src>
import functools
import math

import jax
import jax.numpy as jnp
from jax.experimental import pallas as pl
from jax.experimental.pallas import tpu as pltpu


def _hgnn_allen_kernel(x_ref, sgs_ref, w_ref, u_ref, v_ref, out_ref,
                       q_scr, k_scr, m_scr, l_scr, acc_scr, *, block_n):
    """One (B-tile, N-tile) grid step of additive attention with online softmax.

    x_ref   : (N, D)    full x, resident in VMEM (needed for b_attn = sgs @ x)
    sgs_ref : (tb, N)   subgraph indicator rows for this B tile
    w_ref   : (D, D)    query projection
    u_ref   : (D, D)    key projection
    v_ref   : (1, D)    attention vector (row layout, D on lanes)
    out_ref : (tb, D)   output tile (written on last N step)
    scratch : q_scr (tb,D), k_scr (N,D), m_scr (tb,1), l_scr (tb,1), acc_scr (tb,D)
    """
    ni = pl.program_id(1)

    @pl.when(ni == 0)
    def _init():
        # b_attn = sgs @ x -> (tb, D); project with W once per B tile.
        # (sgs @ x) @ W association: tb <= N here, so this is the cheaper order.
        b_attn = jnp.dot(sgs_ref[...], x_ref[...],
                         preferred_element_type=jnp.float32)
        q_scr[...] = jnp.dot(b_attn, w_ref[...],
                             preferred_element_type=jnp.float32)
        # Key projection for ALL of x in one MXU call, cached for every N tile
        # of this B tile (scratch persists across the inner ni sweep).
        k_scr[...] = jnp.dot(x_ref[...], u_ref[...],
                             preferred_element_type=jnp.float32)
        m_scr[...] = jnp.full_like(m_scr, -jnp.inf)
        l_scr[...] = jnp.zeros_like(l_scr)
        acc_scr[...] = jnp.zeros_like(acc_scr)

    # Current N tile of x and its cached key projection (VMEM views, no DMA).
    start = pl.multiple_of(ni * block_n, block_n)
    x_tile = x_ref[pl.ds(start, block_n), :]                       # (tn, D)
    k_part = k_scr[pl.ds(start, block_n), :]                       # (tn, D)

    # Additive attention: tanh(qW + kU) . v
    inter = jnp.tanh(q_scr[...][:, None, :] + k_part[None, :, :])  # (tb, tn, D), EUP
    v_row = v_ref[0, :]                                            # (D,)
    # VPU multiply + XLU lane reduction instead of a (tb*tn, D) x (D, 1) matmul.
    scores = jnp.sum(inter * v_row[None, None, :], axis=-1)        # (tb, tn)

    # Online softmax update, with attn @ x fused into the running accumulator.
    m_new = jnp.maximum(m_scr[...], jnp.max(scores, axis=-1, keepdims=True))
    alpha = jnp.exp(m_scr[...] - m_new)
    p = jnp.exp(scores - m_new)
    l_scr[...] = alpha * l_scr[...] + jnp.sum(p, axis=-1, keepdims=True)
    acc_scr[...] = alpha * acc_scr[...] + jnp.dot(
        p, x_tile, preferred_element_type=jnp.float32)
    m_scr[...] = m_new

    @pl.when(ni == pl.num_programs(1) - 1)
    def _finalize():
        out_ref[...] = (acc_scr[...] *
                        pl.reciprocal(l_scr[...], approx=True)
                        ).astype(out_ref.dtype)


def _pick_tile(dim, preferred, align=8):
    """Largest tile <= preferred that divides dim and is a multiple of `align`
    (falls back to the full dim)."""
    if dim <= preferred:
        return dim
    start = preferred - (preferred % align) if preferred % align else preferred
    for t in range(start, 0, -align):
        if dim % t == 0:
            return t
    return dim


def hgnn_sg_attn_allen(x, sgs, W, U, v, *, block_b=None, block_n=None):
    """x:(N,D) f32, sgs:(B,N) f32, W:(D,D), U:(D,D), v:(D,1) -> (B,D) f32."""
    N, D = x.shape
    B = sgs.shape[0]

    # Tile sizes: sized so tb*tn*D f32 intermediates stay far below the 32 MiB
    # scoped VMEM budget (v7x has only 64 MiB physical VMEM).
    tb = _pick_tile(B, block_b if block_b is not None else 128)
    tn = _pick_tile(N, block_n if block_n is not None else 512)

    v_row = v.reshape(1, D)  # row layout: D on lanes
    kernel = functools.partial(_hgnn_allen_kernel, block_n=tn)
    grid = (B // tb, N // tn)

    return pl.pallas_call(
        kernel,
        out_shape=jax.ShapeDtypeStruct((B, D), jnp.float32),
        grid_spec=pltpu.PrefetchScalarGridSpec(
            num_scalar_prefetch=0,
            grid=grid,
            in_specs=[
                pl.BlockSpec((N, D), lambda bi, ni: (0, 0)),    # x: resident
                pl.BlockSpec((tb, N), lambda bi, ni: (bi, 0)),  # sgs: tile over B
                pl.BlockSpec((D, D), lambda bi, ni: (0, 0)),    # W: resident
                pl.BlockSpec((D, D), lambda bi, ni: (0, 0)),    # U: resident
                pl.BlockSpec((1, D), lambda bi, ni: (0, 0)),    # v: resident
            ],
            out_specs=pl.BlockSpec((tb, D), lambda bi, ni: (bi, 0)),
            scratch_shapes=[
                pltpu.VMEM((tb, D), jnp.float32),  # q_part = (sgs @ x) @ W
                pltpu.VMEM((N, D), jnp.float32),   # cached key projection x @ U
                pltpu.VMEM((tb, 1), jnp.float32),  # running max
                pltpu.VMEM((tb, 1), jnp.float32),  # running denom
                pltpu.VMEM((tb, D), jnp.float32),  # running output accumulator
            ],
        ),
        compiler_params=pltpu.CompilerParams(
            dimension_semantics=("parallel", "arbitrary"),
            vmem_limit_bytes=32 * 1024 * 1024,
        ),
    )(x, sgs, W, U, v_row)


def reference(x, sgs, W, U, v):
    """Pure-JAX reference (AllenNLP AdditiveAttention, normalize=True)."""
    b_attn = sgs @ x                                                   # (B, D)
    inter = jnp.tanh((b_attn @ W)[:, None, :] + (x @ U)[None, :, :])   # (B, N, D)
    scores = (inter @ v)[..., 0]                                       # (B, N)
    attn = jax.nn.softmax(scores, axis=-1)
    return attn @ x                                                    # (B, D)


if __name__ == "__main__":
    # Small shapes implied by the forward: x (N, vdim), sgs (B, N)
    N, D, B = 16, 32, 16          # vdim = mdim = 32

    key = jax.random.PRNGKey(0)
    kx, ks, kw, ku, kv = jax.random.split(key, 5)

    x = jax.random.normal(kx, (N, D), dtype=jnp.float32)
    sgs = (jax.random.uniform(ks, (B, N)) > 0.5).astype(jnp.float32)  # subgraph indicators

    # Deterministic parameter init (xavier-uniform-ish, as in AllenNLP AdditiveAttention)
    bound_w = math.sqrt(6.0 / (D + D))
    W = jax.random.uniform(kw, (D, D), minval=-bound_w, maxval=bound_w, dtype=jnp.float32)
    U = jax.random.uniform(ku, (D, D), minval=-bound_w, maxval=bound_w, dtype=jnp.float32)
    bound_v = math.sqrt(6.0 / (D + 1))
    v = jax.random.uniform(kv, (D, 1), minval=-bound_v, maxval=bound_v, dtype=jnp.float32)

    # Small tiles so the demo exercises both grid axes (grid = (2, 2)).
    out = hgnn_sg_attn_allen(x, sgs, W, U, v, block_b=8, block_n=8)
    jax.block_until_ready(out)

    ref = reference(x, sgs, W, U, v)
    assert out.shape == (B, D)
    assert jnp.allclose(out, ref, atol=1e-3, rtol=1e-3), "mismatch vs reference"

    print("KERNEL_OK")
</pallas_src>

<mosaic_0001>
module attributes {stable_mosaic.version = 11 : i64} {
  func.func @_hgnn_allen_kernel(%arg0: i32, %arg1: i32, %arg2: memref<16x32xf32, #tpu.memory_space<vmem>>, %arg3: memref<8x16xf32, #tpu.memory_space<vmem>>, %arg4: memref<32x32xf32, #tpu.memory_space<vmem>>, %arg5: memref<32x32xf32, #tpu.memory_space<vmem>>, %arg6: memref<1x32xf32, #tpu.memory_space<vmem>>, %arg7: memref<8x32xf32, #tpu.memory_space<vmem>>, %arg8: memref<8x32xf32, #tpu.memory_space<vmem>>, %arg9: memref<16x32xf32, #tpu.memory_space<vmem>>, %arg10: memref<8x1xf32, #tpu.memory_space<vmem>>, %arg11: memref<8x1xf32, #tpu.memory_space<vmem>>, %arg12: memref<8x32xf32, #tpu.memory_space<vmem>>) attributes {dimension_semantics = [#tpu.dimension_semantics<parallel>, #tpu.dimension_semantics<arbitrary>], iteration_bounds = array<i64: 2, 2>, scalar_prefetch = 0 : i64, scratch_operands = 5 : i64, tpu.core_type = #tpu.core_type<tc>, window_params = [{pipeline_mode = #tpu.pipeline_mode<synchronous>, transform_indices = @transform_0, window_bounds = array<i64: 16, 32>}, {transform_indices = @transform_1, window_bounds = array<i64: 8, 16>}, {pipeline_mode = #tpu.pipeline_mode<synchronous>, transform_indices = @transform_2, window_bounds = array<i64: 32, 32>}, {pipeline_mode = #tpu.pipeline_mode<synchronous>, transform_indices = @transform_3, window_bounds = array<i64: 32, 32>}, {pipeline_mode = #tpu.pipeline_mode<synchronous>, transform_indices = @transform_4, window_bounds = array<i64: 1, 32>}, {transform_indices = @transform_5, window_bounds = array<i64: 8, 32>}]} {
    %c0_i32 = arith.constant 0 : i32
    %0 = arith.cmpi eq, %arg1, %c0_i32 : i32
    %1 = arith.extui %0 : i1 to i32
    %c0_i32_0 = arith.constant 0 : i32
    %2 = arith.cmpi ne, %1, %c0_i32_0 : i32
    scf.if %2 {
      %c0_24 = arith.constant 0 : index
      %c0_25 = arith.constant 0 : index
      %48 = vector.load %arg3[%c0_24, %c0_25] : memref<8x16xf32, #tpu.memory_space<vmem>>, vector<8x16xf32>
      %c0_26 = arith.constant 0 : index
      %c0_27 = arith.constant 0 : index
      %49 = vector.load %arg2[%c0_26, %c0_27] : memref<16x32xf32, #tpu.memory_space<vmem>>, vector<16x32xf32>
      %cst_28 = arith.constant dense<0.000000e+00> : vector<8x32xf32>
      %50 = tpu.matmul %48, %49, %cst_28 {dimension_numbers = #tpu.dot_dimension_numbers<[1], [0], [0], [1], [0, 0, 1, 1], [], []>} : vector<8x16xf32>, vector<16x32xf32>, vector<8x32xf32> -> vector<8x32xf32>
      %c0_29 = arith.constant 0 : index
      %c0_30 = arith.constant 0 : index
      %51 = vector.load %arg4[%c0_29, %c0_30] : memref<32x32xf32, #tpu.memory_space<vmem>>, vector<32x32xf32>
      %cst_31 = arith.constant dense<0.000000e+00> : vector<8x32xf32>
      %52 = tpu.matmul %50, %51, %cst_31 {dimension_numbers = #tpu.dot_dimension_numbers<[1], [0], [0], [1], [0, 0, 1, 1], [], []>} : vector<8x32xf32>, vector<32x32xf32>, vector<8x32xf32> -> vector<8x32xf32>
      %c0_32 = arith.constant 0 : index
      %c0_33 = arith.constant 0 : index
      %53 = vector.load %arg8[%c0_32, %c0_33] : memref<8x32xf32, #tpu.memory_space<vmem>>, vector<8x32xf32>
      tpu.vector_store %arg8[%c0_32, %c0_33], %52 {strides = array<i32>} : memref<8x32xf32, #tpu.memory_space<vmem>>, vector<8x32xf32>,
      %c0_34 = arith.constant 0 : index
      %c0_35 = arith.constant 0 : index
      %54 = vector.load %arg2[%c0_34, %c0_35] : memref<16x32xf32, #tpu.memory_space<vmem>>, vector<16x32xf32>
      %c0_36 = arith.constant 0 : index
      %c0_37 = arith.constant 0 : index
      %55 = vector.load %arg5[%c0_36, %c0_37] : memref<32x32xf32, #tpu.memory_space<vmem>>, vector<32x32xf32>
      %cst_38 = arith.constant dense<0.000000e+00> : vector<16x32xf32>
      %56 = tpu.matmul %54, %55, %cst_38 {dimension_numbers = #tpu.dot_dimension_numbers<[1], [0], [0], [1], [0, 0, 1, 1], [], []>} : vector<16x32xf32>, vector<32x32xf32>, vector<16x32xf32> -> vector<16x32xf32>
      %c0_39 = arith.constant 0 : index
      %c0_40 = arith.constant 0 : index
      %57 = vector.load %arg9[%c0_39, %c0_40] : memref<16x32xf32, #tpu.memory_space<vmem>>, vector<16x32xf32>
      tpu.vector_store %arg9[%c0_39, %c0_40], %56 {strides = array<i32>} : memref<16x32xf32, #tpu.memory_space<vmem>>, vector<16x32xf32>,
      %cst_41 = arith.constant 0xFF800000 : f32
      %58 = vector.broadcast %cst_41 : f32 to vector<8x1xf32>
      %c0_42 = arith.constant 0 : index
      %c0_43 = arith.constant 0 : index
      %59 = vector.load %arg10[%c0_42, %c0_43] : memref<8x1xf32, #tpu.memory_space<vmem>>, vector<8x1xf32>
      tpu.vector_store %arg10[%c0_42, %c0_43], %58 {strides = array<i32>} : memref<8x1xf32, #tpu.memory_space<vmem>>, vector<8x1xf32>,
      %cst_44 = arith.constant 0.000000e+00 : f32
      %60 = vector.broadcast %cst_44 : f32 to vector<8x1xf32>
      %c0_45 = arith.constant 0 : index
      %c0_46 = arith.constant 0 : index
      %61 = vector.load %arg11[%c0_45, %c0_46] : memref<8x1xf32, #tpu.memory_space<vmem>>, vector<8x1xf32>
      tpu.vector_store %arg11[%c0_45, %c0_46], %60 {strides = array<i32>} : memref<8x1xf32, #tpu.memory_space<vmem>>, vector<8x1xf32>,
      %cst_47 = arith.constant 0.000000e+00 : f32
      %62 = vector.broadcast %cst_47 : f32 to vector<8x32xf32>
      %c0_48 = arith.constant 0 : index
      %c0_49 = arith.constant 0 : index
      %63 = vector.load %arg12[%c0_48, %c0_49] : memref<8x32xf32, #tpu.memory_space<vmem>>, vector<8x32xf32>
      tpu.vector_store %arg12[%c0_48, %c0_49], %62 {strides = array<i32>} : memref<8x32xf32, #tpu.memory_space<vmem>>, vector<8x32xf32>,
    } else {
    }
    %c8_i32 = arith.constant 8 : i32
    %3 = arith.muli %arg1, %c8_i32 : i32
    %4 = tpu.assume_multiple %3, 8 : i32
    %5 = arith.index_cast %4 : i32 to index
    %c0 = arith.constant 0 : index
    %6 = vector.load %arg2[%5, %c0] : memref<16x32xf32, #tpu.memory_space<vmem>>, vector<8x32xf32>
    %7 = arith.index_cast %4 : i32 to index
    %c0_1 = arith.constant 0 : index
    %8 = vector.load %arg9[%7, %c0_1] : memref<16x32xf32, #tpu.memory_space<vmem>>, vector<8x32xf32>
    %c0_2 = arith.constant 0 : index
    %c0_3 = arith.constant 0 : index
    %9 = vector.load %arg8[%c0_2, %c0_3] : memref<8x32xf32, #tpu.memory_space<vmem>>, vector<8x32xf32>
    %10 = vector.shape_cast %9 : vector<8x32xf32> to vector<8x1x32xf32>
    %11 = vector.shape_cast %8 : vector<8x32xf32> to vector<1x8x32xf32>
    %12 = vector.broadcast %10 : vector<8x1x32xf32> to vector<8x8x32xf32>
    %13 = vector.broadcast %11 : vector<1x8x32xf32> to vector<8x8x32xf32>
    %14 = arith.addf %12, %13 : vector<8x8x32xf32>
    %15 = math.tanh %14 : vector<8x8x32xf32>
    %c0_4 = arith.constant 0 : index
    %c0_5 = arith.constant 0 : index
    %16 = vector.load %arg6[%c0_4, %c0_5] : memref<1x32xf32, #tpu.memory_space<vmem>>, vector<1x32xf32>
    %17 = vector.shape_cast %16 : vector<1x32xf32> to vector<32xf32>
    %18 = vector.shape_cast %17 : vector<32xf32> to vector<1x1x32xf32>
    %19 = vector.broadcast %18 : vector<1x1x32xf32> to vector<8x8x32xf32>
    %20 = arith.mulf %15, %19 : vector<8x8x32xf32>
    %cst = arith.constant dense<0.000000e+00> : vector<8x8xf32>
    %21 = vector.multi_reduction <add>, %20, %cst [2] : vector<8x8x32xf32> to vector<8x8xf32>
    %c0_6 = arith.constant 0 : index
    %c0_7 = arith.constant 0 : index
    %22 = vector.load %arg10[%c0_6, %c0_7] : memref<8x1xf32, #tpu.memory_space<vmem>>, vector<8x1xf32>
    %cst_8 = arith.constant dense<0xFF800000> : vector<8xf32>
    %23 = vector.multi_reduction <maximumf>, %21, %cst_8 [1] : vector<8x8xf32> to vector<8xf32>
    %24 = vector.shape_cast %23 : vector<8xf32> to vector<8x1xf32>
    %25 = arith.maximumf %22, %24 : vector<8x1xf32>
    %c0_9 = arith.constant 0 : index
    %c0_10 = arith.constant 0 : index
    %26 = vector.load %arg10[%c0_9, %c0_10] : memref<8x1xf32, #tpu.memory_space<vmem>>, vector<8x1xf32>
    %27 = arith.subf %26, %25 : vector<8x1xf32>
    %28 = math.exp %27 : vector<8x1xf32>
    %29 = vector.broadcast %25 : vector<8x1xf32> to vector<8x8xf32>
    %30 = arith.subf %21, %29 : vector<8x8xf32>
    %31 = math.exp %30 : vector<8x8xf32>
    %c0_11 = arith.constant 0 : index
    %c0_12 = arith.constant 0 : index
    %32 = vector.load %arg11[%c0_11, %c0_12] : memref<8x1xf32, #tpu.memory_space<vmem>>, vector<8x1xf32>
    %33 = arith.mulf %28, %32 : vector<8x1xf32>
    %cst_13 = arith.constant dense<0.000000e+00> : vector<8xf32>
    %34 = vector.multi_reduction <add>, %31, %cst_13 [1] : vector<8x8xf32> to vector<8xf32>
    %35 = vector.shape_cast %34 : vector<8xf32> to vector<8x1xf32>
    %36 = arith.addf %33, %35 : vector<8x1xf32>
    %c0_14 = arith.constant 0 : index
    %c0_15 = arith.constant 0 : index
    %37 = vector.load %arg11[%c0_14, %c0_15] : memref<8x1xf32, #tpu.memory_space<vmem>>, vector<8x1xf32>
    tpu.vector_store %arg11[%c0_14, %c0_15], %36 {strides = array<i32>} : memref<8x1xf32, #tpu.memory_space<vmem>>, vector<8x1xf32>,
    %c0_16 = arith.constant 0 : index
    %c0_17 = arith.constant 0 : index
    %38 = vector.load %arg12[%c0_16, %c0_17] : memref<8x32xf32, #tpu.memory_space<vmem>>, vector<8x32xf32>
    %39 = vector.broadcast %28 : vector<8x1xf32> to vector<8x32xf32>
    %40 = arith.mulf %39, %38 : vector<8x32xf32>
    %cst_18 = arith.constant dense<0.000000e+00> : vector<8x32xf32>
    %41 = tpu.matmul %31, %6, %cst_18 {dimension_numbers = #tpu.dot_dimension_numbers<[1], [0], [0], [1], [0, 0, 1, 1], [], []>} : vector<8x8xf32>, vector<8x32xf32>, vector<8x32xf32> -> vector<8x32xf32>
    %42 = arith.addf %40, %41 : vector<8x32xf32>
    %c0_19 = arith.constant 0 : index
    %c0_20 = arith.constant 0 : index
    %43 = vector.load %arg12[%c0_19, %c0_20] : memref<8x32xf32, #tpu.memory_space<vmem>>, vector<8x32xf32>
    tpu.vector_store %arg12[%c0_19, %c0_20], %42 {strides = array<i32>} : memref<8x32xf32, #tpu.memory_space<vmem>>, vector<8x32xf32>,
    %c0_21 = arith.constant 0 : index
    %c0_22 = arith.constant 0 : index
    %44 = vector.load %arg10[%c0_21, %c0_22] : memref<8x1xf32, #tpu.memory_space<vmem>>, vector<8x1xf32>
    tpu.vector_store %arg10[%c0_21, %c0_22], %25 {strides = array<i32>} : memref<8x1xf32, #tpu.memory_space<vmem>>, vector<8x1xf32>,
    %c1_i32 = arith.constant 1 : i32
    %45 = arith.cmpi eq, %arg1, %c1_i32 : i32
    %46 = arith.extui %45 : i1 to i32
    %c0_i32_23 = arith.constant 0 : i32
    %47 = arith.cmpi ne, %46, %c0_i32_23 : i32
    scf.if %47 {
      %c0_24 = arith.constant 0 : index
      %c0_25 = arith.constant 0 : index
      %48 = vector.load %arg12[%c0_24, %c0_25] : memref<8x32xf32, #tpu.memory_space<vmem>>, vector<8x32xf32>
      %c0_26 = arith.constant 0 : index
      %c0_27 = arith.constant 0 : index
      %49 = vector.load %arg11[%c0_26, %c0_27] : memref<8x1xf32, #tpu.memory_space<vmem>>, vector<8x1xf32>
      %50 = tpu.reciprocal %49 {approx = true} : vector<8x1xf32> -> vector<8x1xf32>
      %51 = vector.broadcast %50 : vector<8x1xf32> to vector<8x32xf32>
      %52 = arith.mulf %48, %51 : vector<8x32xf32>
      %c0_28 = arith.constant 0 : index
      %c0_29 = arith.constant 0 : index
      %53 = vector.load %arg7[%c0_28, %c0_29] : memref<8x32xf32, #tpu.memory_space<vmem>>, vector<8x32xf32>
      tpu.vector_store %arg7[%c0_28, %c0_29], %52 {strides = array<i32>} : memref<8x32xf32, #tpu.memory_space<vmem>>, vector<8x32xf32>,
    } else {
    }
    return
  }
  func.func @transform_0(%arg0: i32, %arg1: i32) -> (i32, i32) {
    %c0_i32 = arith.constant 0 : i32
    %c0_i32_0 = arith.constant 0 : i32
    %c0_i32_1 = arith.constant 0 : i32
    return %c0_i32, %c0_i32_0 : i32, i32
  }
  func.func @transform_1(%arg0: i32, %arg1: i32) -> (i32, i32) {
    %c0_i32 = arith.constant 0 : i32
    %c0_i32_0 = arith.constant 0 : i32
    return %arg0, %c0_i32 : i32, i32
  }
  func.func @transform_2(%arg0: i32, %arg1: i32) -> (i32, i32) {
    %c0_i32 = arith.constant 0 : i32
    %c0_i32_0 = arith.constant 0 : i32
    %c0_i32_1 = arith.constant 0 : i32
    return %c0_i32, %c0_i32_0 : i32, i32
  }
  func.func @transform_3(%arg0: i32, %arg1: i32) -> (i32, i32) {
    %c0_i32 = arith.constant 0 : i32
    %c0_i32_0 = arith.constant 0 : i32
    %c0_i32_1 = arith.constant 0 : i32
    return %c0_i32, %c0_i32_0 : i32, i32
  }
  func.func @transform_4(%arg0: i32, %arg1: i32) -> (i32, i32) {
    %c0_i32 = arith.constant 0 : i32
    %c0_i32_0 = arith.constant 0 : i32
    %c0_i32_1 = arith.constant 0 : i32
    return %c0_i32, %c0_i32_0 : i32, i32
  }
  func.func @transform_5(%arg0: i32, %arg1: i32) -> (i32, i32) {
    %c0_i32 = arith.constant 0 : i32
    %c0_i32_0 = arith.constant 0 : i32
    return %arg0, %c0_i32 : i32, i32
  }
}

</mosaic_0001>

<llo_original>
// kernel: tpu_custom_call.1
$region0: #{tpu_custom_call.1}
  #allocation0 [shape = 'u32[]', space=smem, size = 0x4, offset = 0x4, fixed_abs, tag = 'smem constant byte address 0x4 - core index']
  #allocation1 [shape = 'u32[144,128]{1,0:T(1,128)}', space=vmem, size = 0x12000, scoped, tag = 'internal scratch']
  #allocation2 [shape = 'f32[8,32]{1,0:T(8,128)}', space=vmem, size = 0x1000, scoped, tag = 'scratch operand']
  #allocation3 [shape = 'f32[16,32]{1,0:T(8,128)}', space=vmem, size = 0x2000, scoped, tag = 'scratch operand']
  #allocation4 [shape = 'f32[8,1]{1,0:T(8,128)}', space=vmem, size = 0x1000, scoped, tag = 'scratch operand']
  #allocation5 [shape = 'f32[8,1]{1,0:T(8,128)}', space=vmem, size = 0x1000, scoped, tag = 'scratch operand']
  #allocation6 [shape = 'f32[8,32]{1,0:T(8,128)}', space=vmem, size = 0x1000, scoped, tag = 'scratch operand']
  %s0 = inlined_call_operand.hbm [shape: f32[16,32], index: 0, kind: input, shape index: {}]
  %s1 = inlined_call_operand.hbm [shape: f32[16,16], index: 1, kind: input, shape index: {}]
  %s2 = inlined_call_operand.hbm [shape: f32[32,32], index: 2, kind: input, shape index: {}]
  %s3 = inlined_call_operand.hbm [shape: f32[32,32], index: 3, kind: input, shape index: {}]
  %s4 = inlined_call_operand.vmem [shape: f32[1,32], index: 4, kind: input, shape index: {}]
  %s5 = inlined_call_operand.hbm [shape: f32[16,32], index: 5, kind: output, shape index: {}]
  %s6 = sld [smem:[#allocation0]]
  $region77: #{tpu_custom_call.1} parent=0
    _
  %s8 = ssub.s32 1, %s6
  %s9 = scalar_select 0, %s8, %s6
  $region1: #{tpu_custom_call.1} parent=0
    #allocation7 [shape = 'u8[8192]{0}', space=vmem, size = 0x2000, scoped, tag = 'input window, operand 0, single buffered']
    #allocation8 [shape = 's32[2]{0}', space=sflag, size = 0x8, scoped, tag = 'scoped memory for tpu_custom_call.1']
    #allocation9 [shape = 's32[2]{0}', space=sflag, size = 0x8, scoped, tag = 'scoped memory for tpu_custom_call.1']
    #allocation10 [shape = 'u8[8192]{0}', space=vmem, size = 0x2000, scoped, tag = 'input window, operand 1']
    #allocation11 [shape = 's32[2]{0}', space=sflag, size = 0x8, scoped, tag = 'scoped memory for tpu_custom_call.1']
    #allocation12 [shape = 'u8[16384]{0}', space=vmem, size = 0x4000, scoped, tag = 'input window, operand 2, single buffered']
    #allocation13 [shape = 'u8[16384]{0}', space=vmem, size = 0x4000, scoped, tag = 'input window, operand 3, single buffered']
    #allocation14 [shape = 's32[1]{0}', space=sflag, size = 0x4, scoped, tag = 'scoped memory for tpu_custom_call.1']
    #allocation15 [shape = 'u8[8192]{0}', space=vmem, size = 0x2000, scoped, tag = 'output window, operand 0']
    %10 = vsyncpa [#allocation8], 0
    %11 = vsyncpa [#allocation11], 0
    %s12 = scalar_lea.sflag [#allocation11], 1
    %13 = vsyncpa %s12, 0
    %14 = vsyncpa [#allocation14], 0
    %15 = vsyncpa [#allocation9], 0
    %s16 = scalar_lea.sflag [#allocation9], 1
    %17 = vsyncpa %s16, 0
    loop: start=0, step=1, limit=6
    $region2: #{tpu_custom_call.1} parent=1 // loop_pre_header
      _
    $region3: #{tpu_custom_call.1} parent=1 // loop_header
      %s19 = sphi 0, %s23
      %p20 = scmp.ge.s32.totalorder %s19, 6
      %s26 = sphi 0, %s38
      %s27 = sphi 0, %s34
      %s28 = sphi 0, %s26
      %s29 = sphi 0, %s27
      %s30 = sphi 0, %s28
      %s31 = sphi 0, %s29
      %s39 = sphi 0, %s39
      %s41 = sphi 0, %s39
      %s42 = sphi 0, %s41
      %s56 = sphi 0, %s42
      %s62 = sphi 0, %s64
      %s65 = sphi 0, %s62
      %s66 = sphi 0, %s65
      %s82 = sphi 0, %s66
      %s86 = sphi 0, %s86
      %s88 = sphi 0, %s86
      %s89 = sphi 0, %s88
      %s103 = sphi 0, %s89
      %s107 = sphi 0, %s107
      %s109 = sphi 0, %s107
      %s110 = sphi 0, %s109
      %s124 = sphi 0, %s110
      %s128 = sphi 0, %s128
      %s130 = sphi 0, %s128
      %s131 = sphi 0, %s130
      %s145 = sphi 0, %s131
      %s151 = sphi 0, %s153
      %s154 = sphi 0, %s151
      %s155 = sphi 0, %s154
      %s171 = sphi 0, %s155
    $region4: #{tpu_custom_call.1} parent=1 // loop_header_branch
      %22 = sbr.rel (%p20) target = $region8
    $region5: #{tpu_custom_call.1} parent=1 // loop_body
      %s24 = ssub.s32 %s19, 1
      %s25 = ssub.s32 %s19, 2
      %s32 = sadd.s32 1, %s27
      %p33 = scmp.ge.s32.totalorder %s32, 2
      %s34 = scalar_select %p33, 0, %s32
      %s35 = sadd.s32 1, %s26
      %s36 = scalar_select %p33, %s35, %s26
      %p37 = scmp.ge.s32.totalorder %s36, 2
      %s38 = scalar_select %p37, 0, %s36
      %s40 = sadd.s32 %s39, 1
      %p43 = scmp.eq.s32.totalorder %s19, 3
      %p44 = scmp.ne.s32.totalorder %s39, %s41
      %p45 = scmp.eq.s32.totalorder %s19, 0
      %p46 = por %p44, %p45
      %p47 = scmp.ne.s32.totalorder %s39, %s41
      %p48 = scmp.eq.s32.totalorder %s24, 3
      %p49 = por %p47, %p48
      %p50 = scmp.ne.s32.totalorder %s41, %s42
      %p51 = scmp.eq.s32.totalorder %s24, 0
      %p52 = por %p50, %p51
      %p53 = scmp.ne.s32.totalorder %s41, %s42
      %p54 = scmp.eq.s32.totalorder %s25, 3
      %p55 = por %p53, %p54
      %p57 = scmp.ne.s32.totalorder %s42, %s56
      %p58 = scmp.eq.s32.totalorder %s25, 0
      %p59 = por %p57, %p58
      %s60 = ssub.s32 %s26, %s38
      %p61 = scmp.eq.s32.totalorder %s60, 0
      %s63 = sadd.s32 %s62, 1
      %s64 = scalar_select %p61, %s62, %s63
      %p67 = pneg %p61
      %p68 = scmp.eq.s32.totalorder %s19, 3
      %p69 = por %p67, %p68
      %p70 = scmp.ne.s32.totalorder %s62, %s65
      %p71 = scmp.eq.s32.totalorder %s19, 0
      %p72 = por %p70, %p71
      %p73 = scmp.ne.s32.totalorder %s62, %s65
      %p74 = scmp.eq.s32.totalorder %s24, 3
      %p75 = por %p73, %p74
      %p76 = scmp.ne.s32.totalorder %s65, %s66
      %p77 = scmp.eq.s32.totalorder %s24, 0
      %p78 = por %p76, %p77
      %p79 = scmp.ne.s32.totalorder %s65, %s66
      %p80 = scmp.eq.s32.totalorder %s25, 3
      %p81 = por %p79, %p80
      %p83 = scmp.ne.s32.totalorder %s66, %s82
      %p84 = scmp.eq.s32.totalorder %s25, 0
      %p85 = por %p83, %p84
      %s87 = sadd.s32 %s86, 1
      %p90 = scmp.eq.s32.totalorder %s19, 3
      %p91 = scmp.ne.s32.totalorder %s86, %s88
      %p92 = scmp.eq.s32.totalorder %s19, 0
      %p93 = por %p91, %p92
      %p94 = scmp.ne.s32.totalorder %s86, %s88
      %p95 = scmp.eq.s32.totalorder %s24, 3
      %p96 = por %p94, %p95
      %p97 = scmp.ne.s32.totalorder %s88, %s89
      %p98 = scmp.eq.s32.totalorder %s24, 0
      %p99 = por %p97, %p98
      %p100 = scmp.ne.s32.totalorder %s88, %s89
      %p101 = scmp.eq.s32.totalorder %s25, 3
      %p102 = por %p100, %p101
      %p104 = scmp.ne.s32.totalorder %s89, %s103
      %p105 = scmp.eq.s32.totalorder %s25, 0
      %p106 = por %p104, %p105
      %s108 = sadd.s32 %s107, 1
      %p111 = scmp.eq.s32.totalorder %s19, 3
      %p112 = scmp.ne.s32.totalorder %s107, %s109
      %p113 = scmp.eq.s32.totalorder %s19, 0
      %p114 = por %p112, %p113
      %p115 = scmp.ne.s32.totalorder %s107, %s109
      %p116 = scmp.eq.s32.totalorder %s24, 3
      %p117 = por %p115, %p116
      %p118 = scmp.ne.s32.totalorder %s109, %s110
      %p119 = scmp.eq.s32.totalorder %s24, 0
      %p120 = por %p118, %p119
      %p121 = scmp.ne.s32.totalorder %s109, %s110
      %p122 = scmp.eq.s32.totalorder %s25, 3
      %p123 = por %p121, %p122
      %p125 = scmp.ne.s32.totalorder %s110, %s124
      %p126 = scmp.eq.s32.totalorder %s25, 0
      %p127 = por %p125, %p126
      %s129 = sadd.s32 %s128, 1
      %p132 = scmp.eq.s32.totalorder %s19, 3
      %p133 = scmp.ne.s32.totalorder %s128, %s130
      %p134 = scmp.eq.s32.totalorder %s19, 0
      %p135 = por %p133, %p134
      %p136 = scmp.ne.s32.totalorder %s128, %s130
      %p137 = scmp.eq.s32.totalorder %s24, 3
      %p138 = por %p136, %p137
      %p139 = scmp.ne.s32.totalorder %s130, %s131
      %p140 = scmp.eq.s32.totalorder %s24, 0
      %p141 = por %p139, %p140
      %p142 = scmp.ne.s32.totalorder %s130, %s131
      %p143 = scmp.eq.s32.totalorder %s25, 3
      %p144 = por %p142, %p143
      %p146 = scmp.ne.s32.totalorder %s131, %s145
      %p147 = scmp.eq.s32.totalorder %s25, 0
      %p148 = por %p146, %p147
      %s149 = ssub.s32 %s26, %s38
      %p150 = scmp.eq.s32.totalorder %s149, 0
      %s152 = sadd.s32 %s151, 1
      %s153 = scalar_select %p150, %s151, %s152
      %p156 = pneg %p150
      %p157 = scmp.eq.s32.totalorder %s19, 3
      %p158 = por %p156, %p157
      %p159 = scmp.ne.s32.totalorder %s151, %s154
      %p160 = scmp.eq.s32.totalorder %s19, 0
      %p161 = por %p159, %p160
      %p162 = scmp.ne.s32.totalorder %s151, %s154
      %p163 = scmp.eq.s32.totalorder %s24, 3
      %p164 = por %p162, %p163
      %p165 = scmp.ne.s32.totalorder %s154, %s155
      %p166 = scmp.eq.s32.totalorder %s24, 0
      %p167 = por %p165, %p166
      %p168 = scmp.ne.s32.totalorder %s154, %s155
      %p169 = scmp.eq.s32.totalorder %s25, 3
      %p170 = por %p168, %p169
      %p172 = scmp.ne.s32.totalorder %s155, %s171
      %p173 = scmp.eq.s32.totalorder %s25, 0
      %p174 = por %p172, %p173
      %p175 = scmp.le.s32.totalorder 1, %s19
      %p176 = scmp.lt.s32.totalorder %s19, 5
      %p177 = pnand %p175, %p176
      %p178 = pneg %p177
      // Predicated region
      $region9: #{tpu_custom_call.1} parent=5 // pred_check
        _
      $region10: #{tpu_custom_call.1} parent=5 // pred_check_branch
        %180 = sbr.rel (%p177) target = $region12
      $region11: #{tpu_custom_call.1} parent=5 // pred_region
        %s181 = ssub.s32 %s19, 1
        // Predicated region
        $region13: #{tpu_custom_call.1} parent=11 // pred_check
          %p182 = pneg %p52
        $region14: #{tpu_custom_call.1} parent=11 // pred_check_branch
          %184 = sbr.rel (%p182) target = $region16
        $region15: #{tpu_custom_call.1} parent=11 // pred_region
          %s186 = ssub.s32 256, 256
          %187 = vsyncadd [#allocation8], %s186
          %s188 = sshll.u32 [#allocation7], 4
          %s189 = int_to_ptr.vmem [resolvable:$true] %s188
          %194 = dma.hbm_to_vmem [thread:$0]  %s0, 256, %s189, [#allocation8], 128, 128, 8
        $region16: #{tpu_custom_call.1} parent=11 // pred_fallthru
          _
        // Predicated region
        $region17: #{tpu_custom_call.1} parent=11 // pred_check
          %p195 = pneg %p99
        $region18: #{tpu_custom_call.1} parent=11 // pred_check_branch
          %197 = sbr.rel (%p195) target = $region20
        $region19: #{tpu_custom_call.1} parent=11 // pred_region
          %s199 = ssub.s32 512, 512
          %200 = vsyncadd [#allocation11], %s199
          %s201 = sshll.u32 [#allocation12], 4
          %s202 = int_to_ptr.vmem [resolvable:$true] %s201
          %207 = dma.hbm_to_vmem [thread:$0]  %s2, 512, %s202, [#allocation11], 128, 128, 8
        $region20: #{tpu_custom_call.1} parent=11 // pred_fallthru
          _
        // Predicated region
        $region21: #{tpu_custom_call.1} parent=11 // pred_check
          %p208 = pneg %p120
        $region22: #{tpu_custom_call.1} parent=11 // pred_check_branch
          %210 = sbr.rel (%p208) target = $region24
        $region23: #{tpu_custom_call.1} parent=11 // pred_region
          %s212 = ssub.s32 512, 512
          %213 = vsyncadd [#allocation14], %s212
          %s214 = sshll.u32 [#allocation13], 4
          %s215 = int_to_ptr.vmem [resolvable:$true] %s214
          %220 = dma.hbm_to_vmem [thread:$0]  %s3, 512, %s215, [#allocation14], 128, 128, 8
        $region24: #{tpu_custom_call.1} parent=11 // pred_fallthru
          _
        // Predicated region
        $region25: #{tpu_custom_call.1} parent=11 // pred_check
          %p221 = pneg %p141
        $region26: #{tpu_custom_call.1} parent=11 // pred_check_branch
          %223 = sbr.rel (%p221) target = $region28
        $region27: #{tpu_custom_call.1} parent=11 // pred_region
          _
        $region28: #{tpu_custom_call.1} parent=11 // pred_fallthru
          _
      $region12: #{tpu_custom_call.1} parent=5 // pred_fallthru
        _
      %p224 = scmp.lt.s32.totalorder %s19, 4
      // Predicated region
      $region29: #{tpu_custom_call.1} parent=5 // pred_check
        %p225 = pneg %p224
      $region30: #{tpu_custom_call.1} parent=5 // pred_check_branch
        %227 = sbr.rel (%p225) target = $region32
      $region31: #{tpu_custom_call.1} parent=5 // pred_region
        // Predicated region
        $region33: #{tpu_custom_call.1} parent=31 // pred_check
          %p228 = pneg %p72
        $region34: #{tpu_custom_call.1} parent=31 // pred_check_branch
          %230 = sbr.rel (%p228) target = $region36
        $region35: #{tpu_custom_call.1} parent=31 // pred_region
          %s231 = sand.u32 %s19, 1
          %s232 = scalar_lea.sflag [#allocation11], %s231
          %s233 = sand.u32 %s62, 1
          %s234 = smul.addr %s233, 8
          %s235 = scalar_lea.vmem [#allocation10], %s234
          %s237 = ssub.s32 128, 128
          %238 = vsyncadd %s232, %s237
          %s239 = smul.addr %s26, 128
          %s240 = scalar_lea.hbm %s1, %s239
          %s242 = sshll.u32 %s235, 4
          %s243 = int_to_ptr.vmem [resolvable:$true] %s242
          %245 = dma.hbm_to_vmem [thread:$0]  %s240, 128, %s243, %s232
        $region36: #{tpu_custom_call.1} parent=31 // pred_fallthru
          _
      $region32: #{tpu_custom_call.1} parent=5 // pred_fallthru
        _
      %p246 = scmp.le.s32.totalorder 1, %s19
      %p247 = scmp.lt.s32.totalorder %s19, 5
      %p248 = pnand %p246, %p247
      %p249 = pneg %p248
      // Predicated region
      $region37: #{tpu_custom_call.1} parent=5 // pred_check
        _
      $region38: #{tpu_custom_call.1} parent=5 // pred_check_branch
        %251 = sbr.rel (%p248) target = $region40
      $region39: #{tpu_custom_call.1} parent=5 // pred_region
        %s252 = ssub.s32 %s19, 1
        // Predicated region
        $region41: #{tpu_custom_call.1} parent=39 // pred_check
          %p253 = pneg %p52
        $region42: #{tpu_custom_call.1} parent=39 // pred_check_branch
          %255 = sbr.rel (%p253) target = $region44
        $region43: #{tpu_custom_call.1} parent=39 // pred_region
          %256 = dma.done [#allocation8], 256
        $region44: #{tpu_custom_call.1} parent=39 // pred_fallthru
          _
        %s257 = sand.u32 %s24, 1
        %s258 = scalar_lea.sflag [#allocation11], %s257
        %s259 = sand.u32 %s65, 1
        %s260 = smul.addr %s259, 8
        %s261 = scalar_lea.vmem [#allocation10], %s260
        // Predicated region
        $region45: #{tpu_custom_call.1} parent=39 // pred_check
          %p262 = pneg %p78
        $region46: #{tpu_custom_call.1} parent=39 // pred_check_branch
          %264 = sbr.rel (%p262) target = $region48
        $region47: #{tpu_custom_call.1} parent=39 // pred_region
          %265 = dma.done %s258, 128
        $region48: #{tpu_custom_call.1} parent=39 // pred_fallthru
          _
        // Predicated region
        $region49: #{tpu_custom_call.1} parent=39 // pred_check
          %p266 = pneg %p99
        $region50: #{tpu_custom_call.1} parent=39 // pred_check_branch
          %268 = sbr.rel (%p266) target = $region52
        $region51: #{tpu_custom_call.1} parent=39 // pred_region
          %269 = dma.done [#allocation11], 512
        $region52: #{tpu_custom_call.1} parent=39 // pred_fallthru
          _
        // Predicated region
        $region53: #{tpu_custom_call.1} parent=39 // pred_check
          %p270 = pneg %p120
        $region54: #{tpu_custom_call.1} parent=39 // pred_check_branch
          %272 = sbr.rel (%p270) target = $region56
        $region55: #{tpu_custom_call.1} parent=39 // pred_region
          %273 = dma.done [#allocation14], 512
        $region56: #{tpu_custom_call.1} parent=39 // pred_fallthru
          _
        %p274 = pneg %p52
        %p275 = pneg %p49
        %s276 = sand.u32 %s24, 1
        %s277 = scalar_lea.sflag [#allocation11], %s276
        %s278 = sand.u32 %s65, 1
        %s279 = smul.addr %s278, 8
        %s280 = scalar_lea.vmem [#allocation10], %s279
        %p281 = pneg %p78
        %p282 = pneg %p75
        %p283 = pneg %p99
        %p284 = pneg %p96
        %p285 = pneg %p120
        %p286 = pneg %p117
        %p287 = pneg %p141
        %p288 = pneg %p138
        %p289 = pneg %p167
        %p290 = pneg %p164
        %s291 = sand.u32 %s154, 1
        %s292 = scalar_lea.sflag [#allocation9], %s291
        %s293 = sand.u32 %s154, 1
        %s294 = smul.addr %s293, 8
        %s295 = scalar_lea.vmem [#allocation15], %s294
        %p296 = scmp.eq.s32.totalorder %s29, 0
        // Predicated region
        $region57: #{tpu_custom_call.1} parent=39 // pred_check
          %p297 = pneg %p296
        $region58: #{tpu_custom_call.1} parent=39 // pred_check_branch
          %299 = sbr.rel (%p297) target = $region60
        $region59: #{tpu_custom_call.1} parent=39 // pred_region
          %v300 = vld [vmem:[%s261] sm:$0xff]
          %v301 = vld [vmem:[#allocation7] sm:$0xff]
          %v302 = vld [vmem:[#allocation7 + $0x8] sm:$0xff]
          %vm303 = vcmask 130048
          %v305 = vsel %vm303, %v300, 0
          %307 = vmatprep.subr.mxu0 0.0
          %308 = vmatpush1.msra.mxu0 %v301
          %309 = vmatprep.subr.mxu0 0.0
          %310 = vmatpush1.msra.mxu0 %v302
          %311 = vmatprep.subr.mxu0 0.0
          %312 = vmatpush1.msra.mxu0 0.0
          %313 = vmatprep.subr.mxu0 0.0
          %314 = vmatpush1.msra.mxu0 0.0
          %315 = vmatprep.subr.mxu0 0.0
          %316 = vmatpush1.msra.mxu0 0.0
          %317 = vmatprep.subr.mxu0 0.0
          %318 = vmatpush1.msra.mxu0 0.0
          %319 = vmatprep.subr.mxu0 0.0
          %320 = vmatpush1.msra.mxu0 0.0
          %321 = vmatprep.subr.mxu0 0.0
          %322 = vmatpush1.msra.mxu0 0.0
          %323 = vmatprep.subr.mxu0 0.0
          %324 = vmatpush1.msra.mxu0 0.0
          %325 = vmatprep.subr.mxu0 0.0
          %326 = vmatpush1.msra.mxu0 0.0
          %327 = vmatprep.subr.mxu0 0.0
          %328 = vmatpush1.msra.mxu0 0.0
          %329 = vmatprep.subr.mxu0 0.0
          %330 = vmatpush1.msra.mxu0 0.0
          %331 = vmatprep.subr.mxu0 0.0
          %332 = vmatpush1.msra.mxu0 0.0
          %333 = vmatprep.subr.mxu0 0.0
          %334 = vmatpush1.msra.mxu0 0.0
          %335 = vmatprep.subr.mxu0 0.0
          %336 = vmatpush1.msra.mxu0 0.0
          %337 = vmatprep.subr.mxu0 0.0
          %338 = vmatpush1.msra.mxu0 0.0
          %339 = vmatprep.subr.mxu0 0.0
          %340 = vmatpush1.msra.mxu0 0.0
          %341 = vmatprep.subr.mxu0 0.0
          %342 = vmatpush1.msra.mxu0 0.0
          %343 = vmatprep.subr.mxu0 0.0
          %344 = vmatpush1.msra.mxu0 0.0
          %345 = vmatprep.subr.mxu0 0.0
          %346 = vmatpush1.msra.mxu0 0.0
          %347 = vmatprep.subr.mxu0 0.0
          %348 = vmatpush1.msra.mxu0 0.0
          %349 = vmatprep.subr.mxu0 0.0
          %350 = vmatpush1.msra.mxu0 0.0
          %351 = vmatprep.subr.mxu0 0.0
          %352 = vmatpush1.msra.mxu0 0.0
          %353 = vmatprep.subr.mxu0 0.0
          %354 = vmatpush1.msra.mxu0 0.0
          %355 = vmatprep.subr.mxu0 0.0
          %356 = vmatpush1.msra.mxu0 0.0
          %357 = vmatprep.subr.mxu0 0.0
          %358 = vmatpush1.msra.mxu0 0.0
          %359 = vmatprep.subr.mxu0 0.0
          %360 = vmatpush1.msra.mxu0 0.0
          %361 = vmatprep.subr.mxu0 0.0
          %362 = vmatpush1.msra.mxu0 0.0
          %363 = vmatprep.subr.mxu0 0.0
          %364 = vmatpush1.msra.mxu0 0.0
          %365 = vmatprep.subr.mxu0 0.0
          %366 = vmatpush1.msra.mxu0 0.0
          %367 = vmatprep.subr.mxu0 0.0
          %368 = vmatpush1.msra.mxu0 0.0
          %369 = vmatprep.subr.mxu0 0.0
          %370 = vmatpush1.msra.mxu0 0.0
          %371 = vmatprep.mubr.f32.mxu0 0.0
          %372 = vmatmul.mubr.f32.gmra.mrb[0].mxu0 %v305
          %v373 = vpop.f32.mrb[0].mxu0
          %v374 = vadd.f32 0.0, %v373
          %v375 = vpop.f32.mrb[0].mxu0
          %376 = vdwg.mxu0
          %v377 = vld [vmem:[#allocation12] sm:$0xff]
          %v378 = vld [vmem:[#allocation12 + $0x8] sm:$0xff]
          %v379 = vld [vmem:[#allocation12 + $0x10] sm:$0xff]
          %v380 = vld [vmem:[#allocation12 + $0x18] sm:$0xff]
          %vm381 = vcmask 261120
          %v383 = vsel %vm381, %v374, 0
          %385 = vmatprep.subr.mxu0 0.0
          %386 = vmatpush1.msra.mxu0 %v377
          %387 = vmatprep.subr.mxu0 0.0
          %388 = vmatpush1.msra.mxu0 %v378
          %389 = vmatprep.subr.mxu0 0.0
          %390 = vmatpush1.msra.mxu0 %v379
          %391 = vmatprep.subr.mxu0 0.0
          %392 = vmatpush1.msra.mxu0 %v380
          %393 = vmatprep.subr.mxu0 0.0
          %394 = vmatpush1.msra.mxu0 0.0
          %395 = vmatprep.subr.mxu0 0.0
          %396 = vmatpush1.msra.mxu0 0.0
          %397 = vmatprep.subr.mxu0 0.0
          %398 = vmatpush1.msra.mxu0 0.0
          %399 = vmatprep.subr.mxu0 0.0
          %400 = vmatpush1.msra.mxu0 0.0
          %401 = vmatprep.subr.mxu0 0.0
          %402 = vmatpush1.msra.mxu0 0.0
          %403 = vmatprep.subr.mxu0 0.0
          %404 = vmatpush1.msra.mxu0 0.0
          %405 = vmatprep.subr.mxu0 0.0
          %406 = vmatpush1.msra.mxu0 0.0
          %407 = vmatprep.subr.mxu0 0.0
          %408 = vmatpush1.msra.mxu0 0.0
          %409 = vmatprep.subr.mxu0 0.0
          %410 = vmatpush1.msra.mxu0 0.0
          %411 = vmatprep.subr.mxu0 0.0
          %412 = vmatpush1.msra.mxu0 0.0
          %413 = vmatprep.subr.mxu0 0.0
          %414 = vmatpush1.msra.mxu0 0.0
          %415 = vmatprep.subr.mxu0 0.0
          %416 = vmatpush1.msra.mxu0 0.0
          %417 = vmatprep.subr.mxu0 0.0
          %418 = vmatpush1.msra.mxu0 0.0
          %419 = vmatprep.subr.mxu0 0.0
          %420 = vmatpush1.msra.mxu0 0.0
          %421 = vmatprep.subr.mxu0 0.0
          %422 = vmatpush1.msra.mxu0 0.0
          %423 = vmatprep.subr.mxu0 0.0
          %424 = vmatpush1.msra.mxu0 0.0
          %425 = vmatprep.subr.mxu0 0.0
          %426 = vmatpush1.msra.mxu0 0.0
          %427 = vmatprep.subr.mxu0 0.0
          %428 = vmatpush1.msra.mxu0 0.0
          %429 = vmatprep.subr.mxu0 0.0
          %430 = vmatpush1.msra.mxu0 0.0
          %431 = vmatprep.subr.mxu0 0.0
          %432 = vmatpush1.msra.mxu0 0.0
          %433 = vmatprep.subr.mxu0 0.0
          %434 = vmatpush1.msra.mxu0 0.0
          %435 = vmatprep.subr.mxu0 0.0
          %436 = vmatpush1.msra.mxu0 0.0
          %437 = vmatprep.subr.mxu0 0.0
          %438 = vmatpush1.msra.mxu0 0.0
          %439 = vmatprep.subr.mxu0 0.0
          %440 = vmatpush1.msra.mxu0 0.0
          %441 = vmatprep.subr.mxu0 0.0
          %442 = vmatpush1.msra.mxu0 0.0
          %443 = vmatprep.subr.mxu0 0.0
          %444 = vmatpush1.msra.mxu0 0.0
          %445 = vmatprep.subr.mxu0 0.0
          %446 = vmatpush1.msra.mxu0 0.0
          %447 = vmatprep.subr.mxu0 0.0
          %448 = vmatpush1.msra.mxu0 0.0
          %449 = vmatprep.mubr.f32.mxu0 0.0
          %450 = vmatmul.mubr.f32.gmra.mrb[0].mxu0 %v383
          %v451 = vpop.f32.mrb[0].mxu0
          %v452 = vadd.f32 0.0, %v451
          %v453 = vpop.f32.mrb[0].mxu0
          %454 = vdwg.mxu0
          %455 = vst.msk [vmem:[#allocation2] sm:$0xff] %vm381, %v452
          %v456 = vld [vmem:[#allocation7] sm:$0xff]
          %v457 = vld [vmem:[#allocation7 + $0x8] sm:$0xff]
          %v458 = vld [vmem:[#allocation13] sm:$0xff]
          %v459 = vld [vmem:[#allocation13 + $0x8] sm:$0xff]
          %v460 = vld [vmem:[#allocation13 + $0x10] sm:$0xff]
          %v461 = vld [vmem:[#allocation13 + $0x18] sm:$0xff]
          %v463 = vsel %vm381, %v456, 0
          %v466 = vsel %vm381, %v457, 0
          %468 = vmatprep.subr.mxu0 0.0
          %469 = vmatpush1.msra.mxu0 %v458
          %470 = vmatprep.subr.mxu0 0.0
          %471 = vmatpush1.msra.mxu0 %v459
          %472 = vmatprep.subr.mxu0 0.0
          %473 = vmatpush1.msra.mxu0 %v460
          %474 = vmatprep.subr.mxu0 0.0
          %475 = vmatpush1.msra.mxu0 %v461
          %476 = vmatprep.subr.mxu0 0.0
          %477 = vmatpush1.msra.mxu0 0.0
          %478 = vmatprep.subr.mxu0 0.0
          %479 = vmatpush1.msra.mxu0 0.0
          %480 = vmatprep.subr.mxu0 0.0
          %481 = vmatpush1.msra.mxu0 0.0
          %482 = vmatprep.subr.mxu0 0.0
          %483 = vmatpush1.msra.mxu0 0.0
          %484 = vmatprep.subr.mxu0 0.0
          %485 = vmatpush1.msra.mxu0 0.0
          %486 = vmatprep.subr.mxu0 0.0
          %487 = vmatpush1.msra.mxu0 0.0
          %488 = vmatprep.subr.mxu0 0.0
          %489 = vmatpush1.msra.mxu0 0.0
          %490 = vmatprep.subr.mxu0 0.0
          %491 = vmatpush1.msra.mxu0 0.0
          %492 = vmatprep.subr.mxu0 0.0
          %493 = vmatpush1.msra.mxu0 0.0
          %494 = vmatprep.subr.mxu0 0.0
          %495 = vmatpush1.msra.mxu0 0.0
          %496 = vmatprep.subr.mxu0 0.0
          %497 = vmatpush1.msra.mxu0 0.0
          %498 = vmatprep.subr.mxu0 0.0
          %499 = vmatpush1.msra.mxu0 0.0
          %500 = vmatprep.subr.mxu0 0.0
          %501 = vmatpush1.msra.mxu0 0.0
          %502 = vmatprep.subr.mxu0 0.0
          %503 = vmatpush1.msra.mxu0 0.0
          %504 = vmatprep.subr.mxu0 0.0
          %505 = vmatpush1.msra.mxu0 0.0
          %506 = vmatprep.subr.mxu0 0.0
          %507 = vmatpush1.msra.mxu0 0.0
          %508 = vmatprep.subr.mxu0 0.0
          %509 = vmatpush1.msra.mxu0 0.0
          %510 = vmatprep.subr.mxu0 0.0
          %511 = vmatpush1.msra.mxu0 0.0
          %512 = vmatprep.subr.mxu0 0.0
          %513 = vmatpush1.msra.mxu0 0.0
          %514 = vmatprep.subr.mxu0 0.0
          %515 = vmatpush1.msra.mxu0 0.0
          %516 = vmatprep.subr.mxu0 0.0
          %517 = vmatpush1.msra.mxu0 0.0
          %518 = vmatprep.subr.mxu0 0.0
          %519 = vmatpush1.msra.mxu0 0.0
          %520 = vmatprep.subr.mxu0 0.0
          %521 = vmatpush1.msra.mxu0 0.0
          %522 = vmatprep.subr.mxu0 0.0
          %523 = vmatpush1.msra.mxu0 0.0
          %524 = vmatprep.subr.mxu0 0.0
          %525 = vmatpush1.msra.mxu0 0.0
          %526 = vmatprep.subr.mxu0 0.0
          %527 = vmatpush1.msra.mxu0 0.0
          %528 = vmatprep.subr.mxu0 0.0
          %529 = vmatpush1.msra.mxu0 0.0
          %530 = vmatprep.subr.mxu0 0.0
          %531 = vmatpush1.msra.mxu0 0.0
          %532 = vmatprep.mubr.f32.mxu0 0.0
          %533 = vmatmul.mubr.f32.gmra.mrb[0].mxu0 %v463
          %v534 = vpop.f32.mrb[0].mxu0
          %v535 = vadd.f32 0.0, %v534
          %v536 = vpop.f32.mrb[0].mxu0
          %537 = vmatprep.mubr.f32.mxu0 0.0
          %538 = vmatmul.mubr.f32.gmra.mrb[0].mxu0 %v466
          %v539 = vpop.f32.mrb[0].mxu0
          %v540 = vadd.f32 0.0, %v539
          %v541 = vpop.f32.mrb[0].mxu0
          %542 = vdwg.mxu0
          %543 = vst.msk [vmem:[#allocation3] sm:$0xff] %vm381, %v535
          %544 = vst.msk [vmem:[#allocation3 + $0x8] sm:$0xff] %vm381, %v540
          %vm545 = vcmask 7168
          %546 = vst.msk [vmem:[#allocation4] sm:$0xff] %vm545, -inf
          %547 = vst.msk [vmem:[#allocation5] sm:$0xff] %vm545, 0.0
          %548 = vst.msk [vmem:[#allocation6] sm:$0xff] %vm381, 0.0
        $region60: #{tpu_custom_call.1} parent=39 // pred_fallthru
          _
        %s549 = smul.u32 %s29, 8
        %s550 = scalar_lea.vmem [#allocation7], %s549
        %v551 = vld [vmem:[%s550] sm:$0xff]
        %s552 = scalar_lea.vmem [#allocation3], %s549
        %v553 = vld [vmem:[%s552] sm:$0xff]
        %v554 = vld [vmem:[#allocation2] sm:$0xff]
        %v556 = vcombine.high %v554, %v554
        %v558 = vunpack.c.l.s4 1966171168
        %v559 = vunpack.c.0.s8 %v558
        %v560 = vlaneseq
        %v561 = vshrl.u32 %v560, 7
        %v562 = vsub.s32 %v559, %v561
        %v563 = vrot.slane %v554, %v562
        %v565 = vunpack.c.l.s4 1966171168
        %v566 = vunpack.c.0.s8 %v565
        %v567 = vlaneseq
        %v568 = vshrl.u32 %v567, 7
        %v569 = vsub.s32 %v566, %v568
        %v570 = vrot.slane %v556, %v569
        %v571 = vcombine.high %v563, %v563
        %v572 = vcombine.high %v570, %v570
        %v574 = vunpack.c.l.s4 1966171168
        %v575 = vunpack.c.0.s8 %v574
        %v576 = vlaneseq
        %v577 = vshrl.u32 %v576, 7
        %v578 = vsub.s32 %v575, %v577
        %v579 = vrot.slane %v563, %v578
        %v581 = vunpack.c.l.s4 1966171168
        %v582 = vunpack.c.0.s8 %v581
        %v583 = vlaneseq
        %v584 = vshrl.u32 %v583, 7
        %v585 = vsub.s32 %v582, %v584
        %v586 = vrot.slane %v570, %v585
        %v588 = vunpack.c.l.s4 1966171168
        %v589 = vunpack.c.0.s8 %v588
        %v590 = vlaneseq
        %v591 = vshrl.u32 %v590, 7
        %v592 = vsub.s32 %v589, %v591
        %v593 = vrot.slane %v571, %v592
        %v595 = vunpack.c.l.s4 1966171168
        %v596 = vunpack.c.0.s8 %v595
        %v597 = vlaneseq
        %v598 = vshrl.u32 %v597, 7
        %v599 = vsub.s32 %v596, %v598
        %v600 = vrot.slane %v572, %v599
        %v601 = vcombine.high %v579, %v579
        %v602 = vcombine.high %v586, %v586
        %v603 = vcombine.high %v593, %v593
        %v604 = vcombine.high %v600, %v600
        %v605 = vlaneseq
        %v606 = vshrl.u32 %v605, 7
        %v607 = vsub.s32 0, %v606
        %v608 = vrot.slane %v579, %v607
        %v609 = vlaneseq
        %v610 = vshrl.u32 %v609, 7
        %v611 = vsub.s32 0, %v610
        %v612 = vrot.slane %v593, %v611
        %v613 = vlaneseq
        %v614 = vshrl.u32 %v613, 7
        %v615 = vsub.s32 0, %v614
        %v616 = vrot.slane %v601, %v615
        %v617 = vlaneseq
        %v618 = vshrl.u32 %v617, 7
        %v619 = vsub.s32 0, %v618
        %v620 = vrot.slane %v603, %v619
        %v621 = vlaneseq
        %v622 = vshrl.u32 %v621, 7
        %v623 = vsub.s32 0, %v622
        %v624 = vrot.slane %v586, %v623
        %v625 = vlaneseq
        %v626 = vshrl.u32 %v625, 7
        %v627 = vsub.s32 0, %v626
        %v628 = vrot.slane %v600, %v627
        %v629 = vlaneseq
        %v630 = vshrl.u32 %v629, 7
        %v631 = vsub.s32 0, %v630
        %v632 = vrot.slane %v602, %v631
        %v633 = vlaneseq
        %v634 = vshrl.u32 %v633, 7
        %v635 = vsub.s32 0, %v634
        %v636 = vrot.slane %v604, %v635
        %v645 = vadd.f32 %v608, %v553
        %v646 = vadd.f32 %v612, %v553
        %v647 = vadd.f32 %v616, %v553
        %v648 = vadd.f32 %v620, %v553
        %v649 = vadd.f32 %v624, %v553
        %v650 = vadd.f32 %v628, %v553
        %v651 = vadd.f32 %v632, %v553
        %v652 = vadd.f32 %v636, %v553
        %v653 = vtanh.pop %v645
        %v654 = vtanh.pop %v646
        %v655 = vtanh.pop %v647
        %v656 = vtanh.pop %v648
        %v657 = vtanh.pop %v649
        %v658 = vtanh.pop %v650
        %v659 = vtanh.pop %v651
        %v660 = vtanh.pop %v652
        %v661 = vld [vmem:[%s4] sm:$0x1]
        %v663 = vlaneseq
        %v664 = vshrl.u32 %v663, 7
        %v665 = vsub.s32 0, %v664
        %v666 = vrot.slane %v661, %v665
        %v668 = vmul.f32 %v653, %v666
        %v669 = vmul.f32 %v654, %v666
        %v670 = vmul.f32 %v655, %v666
        %v671 = vmul.f32 %v656, %v666
        %v672 = vmul.f32 %v657, %v666
        %v673 = vmul.f32 %v658, %v666
        %v674 = vmul.f32 %v659, %v666
        %v675 = vmul.f32 %v660, %v666
        %vm676 = vcmask 261120
        %v677 = vsel %vm676, %v668, 0.0
        %678 = vadd.xlane.f32.xlu0 %v677
        %v679 = vpop.xlane.xlu0 %678
        %v680 = vsel %vm676, %v669, 0.0
        %681 = vadd.xlane.f32.xlu0 %v680
        %v682 = vpop.xlane.xlu0 %681
        %v683 = vsel %vm676, %v670, 0.0
        %684 = vadd.xlane.f32.xlu0 %v683
        %v685 = vpop.xlane.xlu0 %684
        %v686 = vsel %vm676, %v671, 0.0
        %687 = vadd.xlane.f32.xlu0 %v686
        %v688 = vpop.xlane.xlu0 %687
        %v689 = vsel %vm676, %v672, 0.0
        %690 = vadd.xlane.f32.xlu0 %v689
        %v691 = vpop.xlane.xlu0 %690
        %v692 = vsel %vm676, %v673, 0.0
        %693 = vadd.xlane.f32.xlu0 %v692
        %v694 = vpop.xlane.xlu0 %693
        %v695 = vsel %vm676, %v674, 0.0
        %696 = vadd.xlane.f32.xlu0 %v695
        %v697 = vpop.xlane.xlu0 %696
        %v698 = vsel %vm676, %v675, 0.0
        %699 = vadd.xlane.f32.xlu0 %v698
        %v700 = vpop.xlane.xlu0 %699
        %v701 = vld [vmem:[#allocation4] sm:$0xff]
        %v710 = vlaneseq
        %v711 = vand.u32 %v710, 127
        %v712 = vlaneseq
        %v713 = vshrl.u32 %v712, 7
        %v714 = vsub.s32 %v711, %v713
        %v715 = vrot.slane %v679, %v714
        %v716 = vlaneseq
        %v717 = vshrl.u32 %v716, 7
        %v718 = vsub.s32 %v711, %v717
        %v719 = vrot.slane %v682, %v718
        %v720 = vlaneseq
        %v721 = vshrl.u32 %v720, 7
        %v722 = vsub.s32 %v711, %v721
        %v723 = vrot.slane %v685, %v722
        %v724 = vlaneseq
        %v725 = vshrl.u32 %v724, 7
        %v726 = vsub.s32 %v711, %v725
        %v727 = vrot.slane %v688, %v726
        %v728 = vlaneseq
        %v729 = vshrl.u32 %v728, 7
        %v730 = vsub.s32 %v711, %v729
        %v731 = vrot.slane %v691, %v730
        %v732 = vlaneseq
        %v733 = vshrl.u32 %v732, 7
        %v734 = vsub.s32 %v711, %v733
        %v735 = vrot.slane %v694, %v734
        %v736 = vlaneseq
        %v737 = vshrl.u32 %v736, 7
        %v738 = vsub.s32 %v711, %v737
        %v739 = vrot.slane %v697, %v738
        %v740 = vlaneseq
        %v741 = vshrl.u32 %v740, 7
        %v742 = vsub.s32 %v711, %v741
        %v743 = vrot.slane %v700, %v742
        %vm744 = vcmask 1041409
        %v745 = vsel %vm744, %v719, %v715
        %vm746 = vcmask 1042434
        %v747 = vsel %vm746, %v723, %v745
        %vm748 = vcmask 1043459
        %v749 = vsel %vm748, %v727, %v747
        %vm750 = vcmask 1044484
        %v751 = vsel %vm750, %v731, %v749
        %vm752 = vcmask 1045509
        %v753 = vsel %vm752, %v735, %v751
        %vm754 = vcmask 1046534
        %v755 = vsel %vm754, %v739, %v753
        %vm756 = vcmask 1047559
        %v757 = vsel %vm756, %v743, %v755
        %vm759 = vcmask 64512
        %v760 = vsel %vm759, %v757, -inf
        %761 = vmax.xlane.f32.xlu0 %v760
        %v762 = vpop.xlane.xlu0 %761
        %v763 = vmax.f32 %v701, %v762
        %v764 = vsub.f32 %v701, %v763
        %v765 = vmul.f32 %v764, 1.442695
        %v766 = vpow.pop %v765
        %768 = vset.pattern.permute.xlu0 0
        %769 = vperm.xlu0 %768, %v763
        %v770 = vpop.permute.xlu0 %769
        %v771 = vlaneseq
        %v772 = vshrl.u32 %v771, 7
        %v773 = vsub.s32 0, %v772
        %v774 = vrot.slane %v770, %v773
        %v775 = vlaneseq
        %v776 = vshrl.u32 %v775, 7
        %v777 = vsub.s32 1, %v776
        %v778 = vrot.slane %v770, %v777
        %v779 = vlaneseq
        %v780 = vshrl.u32 %v779, 7
        %v781 = vsub.s32 2, %v780
        %v782 = vrot.slane %v770, %v781
        %v783 = vlaneseq
        %v784 = vshrl.u32 %v783, 7
        %v785 = vsub.s32 3, %v784
        %v786 = vrot.slane %v770, %v785
        %v787 = vlaneseq
        %v788 = vshrl.u32 %v787, 7
        %v789 = vsub.s32 4, %v788
        %v790 = vrot.slane %v770, %v789
        %v791 = vlaneseq
        %v792 = vshrl.u32 %v791, 7
        %v793 = vsub.s32 5, %v792
        %v794 = vrot.slane %v770, %v793
        %v795 = vlaneseq
        %v796 = vshrl.u32 %v795, 7
        %v797 = vsub.s32 6, %v796
        %v798 = vrot.slane %v770, %v797
        %v799 = vlaneseq
        %v800 = vshrl.u32 %v799, 7
        %v801 = vsub.s32 7, %v800
        %v802 = vrot.slane %v770, %v801
        %v811 = vsub.f32 %v679, %v774
        %v812 = vsub.f32 %v682, %v778
        %v813 = vsub.f32 %v685, %v782
        %v814 = vsub.f32 %v688, %v786
        %v815 = vsub.f32 %v691, %v790
        %v816 = vsub.f32 %v694, %v794
        %v817 = vsub.f32 %v697, %v798
        %v818 = vsub.f32 %v700, %v802
        %v819 = vmul.f32 %v811, 1.442695
        %v820 = vpow.pop %v819
        %v821 = vmul.f32 %v812, 1.442695
        %v822 = vpow.pop %v821
        %v823 = vmul.f32 %v813, 1.442695
        %v824 = vpow.pop %v823
        %v825 = vmul.f32 %v814, 1.442695
        %v826 = vpow.pop %v825
        %v827 = vmul.f32 %v815, 1.442695
        %v828 = vpow.pop %v827
        %v829 = vmul.f32 %v816, 1.442695
        %v830 = vpow.pop %v829
        %v831 = vmul.f32 %v817, 1.442695
        %v832 = vpow.pop %v831
        %v833 = vmul.f32 %v818, 1.442695
        %v834 = vpow.pop %v833
        %v835 = vld [vmem:[#allocation5] sm:$0xff]
        %v836 = vmul.f32 %v766, %v835
        %845 = vset.pattern.permute.xlu0 0
        %846 = vperm.xlu0 %845, %v820
        %v847 = vpop.permute.xlu0 %846
        %848 = vset.pattern.permute.xlu0 0
        %849 = vperm.xlu0 %848, %v822
        %v850 = vpop.permute.xlu0 %849
        %851 = vset.pattern.permute.xlu0 0
        %852 = vperm.xlu0 %851, %v824
        %v853 = vpop.permute.xlu0 %852
        %854 = vset.pattern.permute.xlu0 0
        %855 = vperm.xlu0 %854, %v826
        %v856 = vpop.permute.xlu0 %855
        %857 = vset.pattern.permute.xlu0 0
        %858 = vperm.xlu0 %857, %v828
        %v859 = vpop.permute.xlu0 %858
        %860 = vset.pattern.permute.xlu0 0
        %861 = vperm.xlu0 %860, %v830
        %v862 = vpop.permute.xlu0 %861
        %863 = vset.pattern.permute.xlu0 0
        %864 = vperm.xlu0 %863, %v832
        %v865 = vpop.permute.xlu0 %864
        %866 = vset.pattern.permute.xlu0 0
        %867 = vperm.xlu0 %866, %v834
        %v868 = vpop.permute.xlu0 %867
        %v869 = vlaneseq
        %v870 = vshrl.u32 %v869, 7
        %v871 = vsub.s32 %v711, %v870
        %v872 = vrot.slane %v847, %v871
        %v873 = vlaneseq
        %v874 = vshrl.u32 %v873, 7
        %v875 = vsub.s32 %v711, %v874
        %v876 = vrot.slane %v850, %v875
        %v877 = vlaneseq
        %v878 = vshrl.u32 %v877, 7
        %v879 = vsub.s32 %v711, %v878
        %v880 = vrot.slane %v853, %v879
        %v881 = vlaneseq
        %v882 = vshrl.u32 %v881, 7
        %v883 = vsub.s32 %v711, %v882
        %v884 = vrot.slane %v856, %v883
        %v885 = vlaneseq
        %v886 = vshrl.u32 %v885, 7
        %v887 = vsub.s32 %v711, %v886
        %v888 = vrot.slane %v859, %v887
        %v889 = vlaneseq
        %v890 = vshrl.u32 %v889, 7
        %v891 = vsub.s32 %v711, %v890
        %v892 = vrot.slane %v862, %v891
        %v893 = vlaneseq
        %v894 = vshrl.u32 %v893, 7
        %v895 = vsub.s32 %v711, %v894
        %v896 = vrot.slane %v865, %v895
        %v897 = vlaneseq
        %v898 = vshrl.u32 %v897, 7
        %v899 = vsub.s32 %v711, %v898
        %v900 = vrot.slane %v868, %v899
        %v901 = vsel %vm744, %v876, %v872
        %v902 = vsel %vm746, %v880, %v901
        %v903 = vsel %vm748, %v884, %v902
        %v904 = vsel %vm750, %v888, %v903
        %v905 = vsel %vm752, %v892, %v904
        %v906 = vsel %vm754, %v896, %v905
        %v907 = vsel %vm756, %v900, %v906
        %v909 = vsel %vm759, %v907, 0.0
        %910 = vadd.xlane.f32.xlu0 %v909
        %v911 = vpop.xlane.xlu0 %910
        %v912 = vadd.f32 %v836, %v911
        %vm913 = vcmask 7168
        %914 = vst.msk [vmem:[#allocation5] sm:$0xff] %vm913, %v912
        %v915 = vld [vmem:[#allocation6] sm:$0xff]
        %917 = vset.pattern.permute.xlu0 0
        %918 = vperm.xlu0 %917, %v766
        %v919 = vpop.permute.xlu0 %918
        %v921 = vmul.f32 %v919, %v915
        %v922 = vsel %vm759, %v907, 0
        %924 = vmatprep.subr.mxu0 0.0
        %925 = vmatpush1.msra.mxu0 %v551
        %926 = vmatprep.subr.mxu0 0.0
        %927 = vmatpush1.msra.mxu0 0.0
        %928 = vmatprep.subr.mxu0 0.0
        %929 = vmatpush1.msra.mxu0 0.0
        %930 = vmatprep.subr.mxu0 0.0
        %931 = vmatpush1.msra.mxu0 0.0
        %932 = vmatprep.subr.mxu0 0.0
        %933 = vmatpush1.msra.mxu0 0.0
        %934 = vmatprep.subr.mxu0 0.0
        %935 = vmatpush1.msra.mxu0 0.0
        %936 = vmatprep.subr.mxu0 0.0
        %937 = vmatpush1.msra.mxu0 0.0
        %938 = vmatprep.subr.mxu0 0.0
        %939 = vmatpush1.msra.mxu0 0.0
        %940 = vmatprep.subr.mxu0 0.0
        %941 = vmatpush1.msra.mxu0 0.0
        %942 = vmatprep.subr.mxu0 0.0
        %943 = vmatpush1.msra.mxu0 0.0
        %944 = vmatprep.subr.mxu0 0.0
        %945 = vmatpush1.msra.mxu0 0.0
        %946 = vmatprep.subr.mxu0 0.0
        %947 = vmatpush1.msra.mxu0 0.0
        %948 = vmatprep.subr.mxu0 0.0
        %949 = vmatpush1.msra.mxu0 0.0
        %950 = vmatprep.subr.mxu0 0.0
        %951 = vmatpush1.msra.mxu0 0.0
        %952 = vmatprep.subr.mxu0 0.0
        %953 = vmatpush1.msra.mxu0 0.0
        %954 = vmatprep.subr.mxu0 0.0
        %955 = vmatpush1.msra.mxu0 0.0
        %956 = vmatprep.subr.mxu0 0.0
        %957 = vmatpush1.msra.mxu0 0.0
        %958 = vmatprep.subr.mxu0 0.0
        %959 = vmatpush1.msra.mxu0 0.0
        %960 = vmatprep.subr.mxu0 0.0
        %961 = vmatpush1.msra.mxu0 0.0
        %962 = vmatprep.subr.mxu0 0.0
        %963 = vmatpush1.msra.mxu0 0.0
        %964 = vmatprep.subr.mxu0 0.0
        %965 = vmatpush1.msra.mxu0 0.0
        %966 = vmatprep.subr.mxu0 0.0
        %967 = vmatpush1.msra.mxu0 0.0
        %968 = vmatprep.subr.mxu0 0.0
        %969 = vmatpush1.msra.mxu0 0.0
        %970 = vmatprep.subr.mxu0 0.0
        %971 = vmatpush1.msra.mxu0 0.0
        %972 = vmatprep.subr.mxu0 0.0
        %973 = vmatpush1.msra.mxu0 0.0
        %974 = vmatprep.subr.mxu0 0.0
        %975 = vmatpush1.msra.mxu0 0.0
        %976 = vmatprep.subr.mxu0 0.0
        %977 = vmatpush1.msra.mxu0 0.0
        %978 = vmatprep.subr.mxu0 0.0
        %979 = vmatpush1.msra.mxu0 0.0
        %980 = vmatprep.subr.mxu0 0.0
        %981 = vmatpush1.msra.mxu0 0.0
        %982 = vmatprep.subr.mxu0 0.0
        %983 = vmatpush1.msra.mxu0 0.0
        %984 = vmatprep.subr.mxu0 0.0
        %985 = vmatpush1.msra.mxu0 0.0
        %986 = vmatprep.subr.mxu0 0.0
        %987 = vmatpush1.msra.mxu0 0.0
        %988 = vmatprep.mubr.f32.mxu0 0.0
        %989 = vmatmul.mubr.f32.gmra.mrb[0].mxu0 %v922
        %v990 = vpop.f32.mrb[0].mxu0
        %v991 = vadd.f32 0.0, %v990
        %v992 = vpop.f32.mrb[0].mxu0
        %993 = vdwg.mxu0
        %v994 = vadd.f32 %v921, %v991
        %995 = vst.msk [vmem:[#allocation6] sm:$0xff] %vm676, %v994
        %996 = vst.msk [vmem:[#allocation4] sm:$0xff] %vm913, %v763
        %p997 = scmp.eq.s32.totalorder %s29, 1
        // Predicated region
        $region61: #{tpu_custom_call.1} parent=39 // pred_check
          %p998 = pneg %p997
        $region62: #{tpu_custom_call.1} parent=39 // pred_check_branch
          %1000 = sbr.rel (%p998) target = $region64
        $region63: #{tpu_custom_call.1} parent=39 // pred_region
          %v1001 = vld [vmem:[#allocation6] sm:$0xff]
          %v1002 = vld [vmem:[#allocation5] sm:$0xff]
          %v1003 = vrcp.pop %v1002
          %1005 = vset.pattern.permute.xlu0 0
          %1006 = vperm.xlu0 %1005, %v1003
          %v1007 = vpop.permute.xlu0 %1006
          %v1009 = vmul.f32 %v1001, %v1007
          %1010 = vst.msk [vmem:[%s295] sm:$0xff] %vm676, %v1009
        $region64: #{tpu_custom_call.1} parent=39 // pred_fallthru
          _
        %s1011 = sand.u32 %s154, 1
        %s1012 = scalar_lea.sflag [#allocation9], %s1011
        %s1013 = sand.u32 %s154, 1
        %s1014 = smul.addr %s1013, 8
        %s1015 = scalar_lea.vmem [#allocation15], %s1014
        // Predicated region
        $region65: #{tpu_custom_call.1} parent=39 // pred_check
          %p1016 = pneg %p164
        $region66: #{tpu_custom_call.1} parent=39 // pred_check_branch
          %1018 = sbr.rel (%p1016) target = $region68
        $region67: #{tpu_custom_call.1} parent=39 // pred_region
          %s1020 = ssub.s32 128, 128
          %1021 = vsyncadd %s1012, %s1020
          %s1022 = smul.addr %s28, 128
          %s1023 = scalar_lea.hbm %s5, %s1022
          %s1025 = sshll.u32 %s1015, 4
          %s1026 = int_to_ptr.vmem [resolvable:$true] %s1025
          %1028 = dma.vmem_to_hbm [thread:$0]  %s1026, 128, %s1023, %s1012
        $region68: #{tpu_custom_call.1} parent=39 // pred_fallthru
          _
      $region40: #{tpu_custom_call.1} parent=5 // pred_fallthru
        _
      %p1029 = scmp.le.s32.totalorder 2, %s19
      // Predicated region
      $region69: #{tpu_custom_call.1} parent=5 // pred_check
        %p1030 = pneg %p1029
      $region70: #{tpu_custom_call.1} parent=5 // pred_check_branch
        %1032 = sbr.rel (%p1030) target = $region72
      $region71: #{tpu_custom_call.1} parent=5 // pred_region
        %s1033 = ssub.s32 %s19, 2
        // Predicated region
        $region73: #{tpu_custom_call.1} parent=71 // pred_check
          %p1034 = pneg %p170
        $region74: #{tpu_custom_call.1} parent=71 // pred_check_branch
          %1036 = sbr.rel (%p1034) target = $region76
        $region75: #{tpu_custom_call.1} parent=71 // pred_region
          %s1037 = sand.u32 %s155, 1
          %s1038 = scalar_lea.sflag [#allocation9], %s1037
          %s1039 = sand.u32 %s155, 1
          %s1040 = smul.addr %s1039, 8
          %s1041 = scalar_lea.vmem [#allocation15], %s1040
          %1042 = dma.done %s1038, 128
        $region76: #{tpu_custom_call.1} parent=71 // pred_fallthru
          _
      $region72: #{tpu_custom_call.1} parent=5 // pred_fallthru
        _
    $region6: #{tpu_custom_call.1} parent=1 // loop_footer
      %s23 = sadd.s32 1, %s19
    $region7: #{tpu_custom_call.1} parent=1 // loop_footer_branch
      %18 = sbr.rel target = $region3
    $region8: #{tpu_custom_call.1} parent=1 // loop_exit
      _
    %1043 = vsyncpa [#allocation8], 1
    %s1044 = scalar_lea.sflag [#allocation8], 1
    %1045 = vsyncpa %s1044, 1
    %1046 = vsyncpa [#allocation11], 1
    %s1047 = scalar_lea.sflag [#allocation11], 1
    %1048 = vsyncpa %s1047, 1
    %1049 = vsyncpa [#allocation14], 1
    %1050 = vsyncpa [#allocation9], 1
    %s1051 = scalar_lea.sflag [#allocation9], 1
    %1052 = vsyncpa %s1051, 1

</llo_original>
